<compile_context>
chip_gen: v6e
topology: v6e:2x2x1
jax: 0.10.0
libtpu: 0.0.40
codegen_flags: <defaults>
</compile_context>

<pallas_src>
import functools

import jax
import jax.numpy as jnp
from jax.experimental import pallas as pl
from jax.experimental.pallas import tpu as pltpu


_ALIGN = 16  # bf16 sublane tile: keep every slab row-block 16-aligned.


def _round_up(n, m):
    return ((n + m - 1) // m) * m


def _choose_tile(batch, max_tile):
    """Lane-dim (batch) tile: multiple of 128, or the full batch if small."""
    if batch < 256:
        return batch          # single tile; block extent == full array dim
    # >=2 grid steps so the "parallel" axis can shard over v7x's 2 TensorCores;
    # tiles stay multiples of 128 lanes (unmasked stores / legal block shape).
    tile = _round_up(-(-batch // 2), 128)
    return max(128, min(max_tile, tile))


# ---------------------------------------------------------------------------
# Kernel
# ---------------------------------------------------------------------------
def _td3_feature_major_kernel(xu_ref, w_ref, b_ref, q_ref, *, kp, h1p, h2p, offs):
    """Dual-head TD3 critic on one batch tile, feature-major (batch on lanes).

    xu_ref : (kp, TILE_B)  f32   zero-padded [x; u]^T
    w_ref  : (R, C)        bf16  weight slab (row layout in pack_td3_params)
    b_ref  : (R, 1)        f32   bias slab (same row layout as w_ref)
    q_ref  : (2, TILE_B)   f32   row 0 = q1, row 1 = q2 (lane-dense output)
    """
    xu = xu_ref[...].astype(jnp.bfloat16)            # bf16 MXU operand

    def q_head(o1, o2, o3):
        # Layer 1: (h1p, kp) @ (kp, TB) -> (h1p, TB), f32 accumulation.
        h1 = jnp.dot(w_ref[o1:o1 + h1p, 0:kp], xu,
                     preferred_element_type=jnp.float32)
        h1 = jnp.maximum(h1 + b_ref[o1:o1 + h1p, :], 0.0).astype(jnp.bfloat16)
        # Layer 2: (h2p, h1p) @ (h1p, TB) -> (h2p, TB).
        h2 = jnp.dot(w_ref[o2:o2 + h2p, 0:h1p], h1,
                     preferred_element_type=jnp.float32)
        h2 = jnp.maximum(h2 + b_ref[o2:o2 + h2p, :], 0.0).astype(jnp.bfloat16)
        # Layer 3: (16, h2p) @ (h2p, TB); only row 0 carries real weights.
        q = jnp.dot(w_ref[o3:o3 + _ALIGN, 0:h2p], h2,
                    preferred_element_type=jnp.float32)
        return q[0:1, :] + b_ref[o3:o3 + 1, :]       # (1, TB)

    (o1a, o1b), (o2a, o2b), (o3a, o3b) = offs
    q_ref[0:1, :] = q_head(o1a, o2a, o3a).astype(q_ref.dtype)
    q_ref[1:2, :] = q_head(o1b, o2b, o3b).astype(q_ref.dtype)


# ---------------------------------------------------------------------------
# Parameter packing (done once per parameter set, outside the forward pass)
# ---------------------------------------------------------------------------
def pack_td3_params(params_q1, params_q2, state_dim, action_dim):
    """Pack both Q-heads into one bf16 weight slab + one f32 bias slab.

    Per-head params are (w1, b1, w2, b2, w3, b3) with weights stored as
    (in_features, out_features) and biases as (1, out_features), i.e.
    y = x @ W + b.  Weights are stored TRANSPOSED (out, in) so the kernel
    computes feature-major matmuls h^T = W^T_packed @ x^T with the batch on
    the lane axis.
    """
    w11, b11, w12, b12, w13, b13 = [jnp.asarray(p, jnp.float32) for p in params_q1]
    w21, b21, w22, b22, w23, b23 = [jnp.asarray(p, jnp.float32) for p in params_q2]

    k = state_dim + action_dim
    h1, h2 = w11.shape[1], w12.shape[1]
    kp = _round_up(k, 8)
    h1p = _round_up(h1, _ALIGN)
    h2p = _round_up(h2, _ALIGN)
    cols = _round_up(max(kp, h1p, h2p), 128)

    def wblock(w_t, rows):
        out = jnp.zeros((rows, cols), jnp.float32)
        return out.at[:w_t.shape[0], :w_t.shape[1]].set(w_t)

    def bblock(b, rows):
        out = jnp.zeros((rows, 1), jnp.float32)
        return out.at[:b.shape[1], 0].set(b.reshape(-1))

    # Row layout (identical for weight and bias slabs; offsets 16-aligned):
    #   [0            : h1p ]  layer-1 head-1   W1a^T (h1, k)
    #   [h1p          : +h1p]  layer-1 head-2
    #   [2h1p         : +h2p]  layer-2 head-1   W2a^T (h2, h1)
    #   [2h1p+h2p     : +h2p]  layer-2 head-2
    #   [2h1p+2h2p    : +16 ]  layer-3 head-1   W3a^T (1, h2)
    #   [2h1p+2h2p+16 : +16 ]  layer-3 head-2
    w_slab = jnp.concatenate([
        wblock(w11.T, h1p), wblock(w21.T, h1p),
        wblock(w12.T, h2p), wblock(w22.T, h2p),
        wblock(w13.T, _ALIGN), wblock(w23.T, _ALIGN),
    ], axis=0).astype(jnp.bfloat16)                  # bf16: native MXU dtype

    b_slab = jnp.concatenate([
        bblock(b11, h1p), bblock(b21, h1p),
        bblock(b12, h2p), bblock(b22, h2p),
        bblock(b13, _ALIGN), bblock(b23, _ALIGN),
    ], axis=0)                                       # f32 biases

    offs = ((0, h1p),
            (2 * h1p, 2 * h1p + h2p),
            (2 * h1p + 2 * h2p, 2 * h1p + 2 * h2p + _ALIGN))
    cfg = dict(state_dim=state_dim, action_dim=action_dim,
               kp=kp, h1p=h1p, h2p=h2p, offs=offs)
    return w_slab, b_slab, cfg


# ---------------------------------------------------------------------------
# Forward wrapper
# ---------------------------------------------------------------------------
def td3_critic_forward(x, u, packed, *, tile_b=1024):
    """x: [B, state_dim], u: [B, action_dim]; packed = pack_td3_params(...).

    Returns (q1, q2), each [B, 1] float32 (matching the PyTorch module).
    """
    w_slab, b_slab, cfg = packed
    x = jnp.asarray(x, jnp.float32)
    u = jnp.asarray(u, jnp.float32)
    B, S = x.shape
    A = u.shape[1]
    assert S == cfg["state_dim"] and A == cfg["action_dim"]
    kp = cfg["kp"]

    # Caller-side packed input: xu^T with the feature axis zero-padded to kp.
    # This tiny (<= 64 B/row) copy lets the kernel run a single K=kp matmul
    # per head with the batch on the lane axis.
    xu_t = jnp.zeros((kp, B), jnp.float32)
    xu_t = xu_t.at[:S, :].set(x.T).at[S:S + A, :].set(u.T)

    tile = _choose_tile(B, tile_b)
    # Partial final block (B % tile != 0): padding columns compute garbage but
    # their writes are clipped on writeback, so results stay correct.
    grid = (pl.cdiv(B, tile),)

    kernel = functools.partial(
        _td3_feature_major_kernel,
        kp=kp, h1p=cfg["h1p"], h2p=cfg["h2p"], offs=cfg["offs"])

    q_t = pl.pallas_call(
        kernel,
        out_shape=jax.ShapeDtypeStruct((2, B), jnp.float32),
        grid=grid,
        in_specs=[
            pl.BlockSpec((kp, tile), lambda i: (0, i)),
            # Weight / bias slabs: same block every step -> VMEM-resident.
            pl.BlockSpec(w_slab.shape, lambda i: (0, 0)),
            pl.BlockSpec(b_slab.shape, lambda i: (0, 0)),
        ],
        out_specs=pl.BlockSpec((2, tile), lambda i: (0, i)),
        compiler_params=pltpu.CompilerParams(
            dimension_semantics=("parallel",)),
    )(xu_t, w_slab, b_slab)

    return q_t[0].reshape(B, 1), q_t[1].reshape(B, 1)


# ---------------------------------------------------------------------------
# Init / reference
# ---------------------------------------------------------------------------
def init_mlp_params(key, dims):
    """Deterministic init for a linear_block with dims=(d0, d1, ..., dk)."""
    params = []
    for in_dim, out_dim in zip(dims, dims[1:]):
        key, kw, kb = jax.random.split(key, 3)
        scale = 1.0 / jnp.sqrt(jnp.float32(in_dim))
        w = jax.random.uniform(kw, (in_dim, out_dim), jnp.float32, -scale, scale)
        b = jax.random.uniform(kb, (1, out_dim), jnp.float32, -scale, scale)
        params += [w, b]
    return params, key


def reference_forward(x, u, params_q1, params_q2):
    """Pure-JAX f32 reference for correctness checking."""
    xu = jnp.concatenate([x, u], axis=1).astype(jnp.float32)

    def mlp(p):
        w1, b1, w2, b2, w3, b3 = p
        h = jnp.maximum(xu @ w1 + b1, 0.0)
        h = jnp.maximum(h @ w2 + b2, 0.0)
        return h @ w3 + b3

    return mlp(params_q1), mlp(params_q2)


if __name__ == "__main__":
    # Small shapes consistent with the module's forward.
    batch = 8
    state_dim = 12
    action_dim = 4
    hidden_dims = (32, 32)
    dims = (state_dim + action_dim,) + hidden_dims + (1,)

    key = jax.random.PRNGKey(0)
    key, kx, ku = jax.random.split(key, 3)
    x = jax.random.normal(kx, (batch, state_dim), jnp.float32)
    u = jax.random.normal(ku, (batch, action_dim), jnp.float32)

    params_q1, key = init_mlp_params(key, dims)
    params_q2, key = init_mlp_params(key, dims)

    # One-time parameter packing (per-head transposed weights, bf16 slab).
    packed = pack_td3_params(params_q1, params_q2, state_dim, action_dim)

    q1, q2 = td3_critic_forward(x, u, packed)
    q1 = jax.block_until_ready(q1)
    q2 = jax.block_until_ready(q2)

    # Sanity check against pure-JAX f32 reference.  bf16 MXU operands =>
    # relaxed tolerance (per review note).
    r1, r2 = reference_forward(x, u, params_q1, params_q2)
    assert q1.shape == (batch, 1) and q2.shape == (batch, 1)
    assert jnp.allclose(q1, r1, atol=2e-2, rtol=2e-2)
    assert jnp.allclose(q2, r2, atol=2e-2, rtol=2e-2)

    print("KERNEL_OK")
</pallas_src>

<mosaic_0001>
module attributes {stable_mosaic.version = 11 : i64} {
  func.func @_td3_feature_major_kernel(%arg0: i32, %arg1: memref<16x8xf32, #tpu.memory_space<vmem>>, %arg2: memref<160x128xbf16, #tpu.memory_space<vmem>>, %arg3: memref<160x1xf32, #tpu.memory_space<vmem>>, %arg4: memref<2x8xf32, #tpu.memory_space<vmem>>) attributes {dimension_semantics = [#tpu.dimension_semantics<parallel>], iteration_bounds = array<i64: 1>, scalar_prefetch = 0 : i64, scratch_operands = 0 : i64, tpu.core_type = #tpu.core_type<tc>, window_params = [{transform_indices = @transform_0, window_bounds = array<i64: 16, 8>}, {pipeline_mode = #tpu.pipeline_mode<synchronous>, transform_indices = @transform_1, window_bounds = array<i64: 160, 128>}, {pipeline_mode = #tpu.pipeline_mode<synchronous>, transform_indices = @transform_2, window_bounds = array<i64: 160, 1>}, {transform_indices = @transform_3, window_bounds = array<i64: 2, 8>}]} {
    %c0 = arith.constant 0 : index
    %c0_0 = arith.constant 0 : index
    %0 = vector.load %arg1[%c0, %c0_0] : memref<16x8xf32, #tpu.memory_space<vmem>>, vector<16x8xf32>
    %1 = arith.truncf %0 : vector<16x8xf32> to vector<16x8xbf16>
    %c0_1 = arith.constant 0 : index
    %c0_2 = arith.constant 0 : index
    %2 = vector.load %arg2[%c0_1, %c0_2] : memref<160x128xbf16, #tpu.memory_space<vmem>>, vector<32x16xbf16>
    %cst = arith.constant dense<0.000000e+00> : vector<32x8xf32>
    %3 = tpu.matmul %2, %1, %cst {dimension_numbers = #tpu.dot_dimension_numbers<[1], [0], [0], [1], [0, 0, 1, 1], [], []>} : vector<32x16xbf16>, vector<16x8xbf16>, vector<32x8xf32> -> vector<32x8xf32>
    %c0_3 = arith.constant 0 : index
    %c0_4 = arith.constant 0 : index
    %4 = vector.load %arg3[%c0_3, %c0_4] : memref<160x1xf32, #tpu.memory_space<vmem>>, vector<32x1xf32>
    %5 = vector.broadcast %4 : vector<32x1xf32> to vector<32x8xf32>
    %6 = arith.addf %3, %5 : vector<32x8xf32>
    %cst_5 = arith.constant 0.000000e+00 : f32
    %7 = vector.broadcast %cst_5 : f32 to vector<32x8xf32>
    %8 = arith.maximumf %6, %7 : vector<32x8xf32>
    %9 = arith.truncf %8 : vector<32x8xf32> to vector<32x8xbf16>
    %c64 = arith.constant 64 : index
    %c0_6 = arith.constant 0 : index
    %10 = vector.load %arg2[%c64, %c0_6] : memref<160x128xbf16, #tpu.memory_space<vmem>>, vector<32x32xbf16>
    %cst_7 = arith.constant dense<0.000000e+00> : vector<32x8xf32>
    %11 = tpu.matmul %10, %9, %cst_7 {dimension_numbers = #tpu.dot_dimension_numbers<[1], [0], [0], [1], [0, 0, 1, 1], [], []>} : vector<32x32xbf16>, vector<32x8xbf16>, vector<32x8xf32> -> vector<32x8xf32>
    %c64_8 = arith.constant 64 : index
    %c0_9 = arith.constant 0 : index
    %12 = vector.load %arg3[%c64_8, %c0_9] : memref<160x1xf32, #tpu.memory_space<vmem>>, vector<32x1xf32>
    %13 = vector.broadcast %12 : vector<32x1xf32> to vector<32x8xf32>
    %14 = arith.addf %11, %13 : vector<32x8xf32>
    %cst_10 = arith.constant 0.000000e+00 : f32
    %15 = vector.broadcast %cst_10 : f32 to vector<32x8xf32>
    %16 = arith.maximumf %14, %15 : vector<32x8xf32>
    %17 = arith.truncf %16 : vector<32x8xf32> to vector<32x8xbf16>
    %c128 = arith.constant 128 : index
    %c0_11 = arith.constant 0 : index
    %18 = vector.load %arg2[%c128, %c0_11] : memref<160x128xbf16, #tpu.memory_space<vmem>>, vector<16x32xbf16>
    %cst_12 = arith.constant dense<0.000000e+00> : vector<16x8xf32>
    %19 = tpu.matmul %18, %17, %cst_12 {dimension_numbers = #tpu.dot_dimension_numbers<[1], [0], [0], [1], [0, 0, 1, 1], [], []>} : vector<16x32xbf16>, vector<32x8xbf16>, vector<16x8xf32> -> vector<16x8xf32>
    %20 = vector.extract_strided_slice %19 {offsets = [0, 0], sizes = [1, 8], strides = [1, 1]} : vector<16x8xf32> to vector<1x8xf32>
    %c128_13 = arith.constant 128 : index
    %c0_14 = arith.constant 0 : index
    %21 = vector.load %arg3[%c128_13, %c0_14] : memref<160x1xf32, #tpu.memory_space<vmem>>, vector<1x1xf32>
    %22 = vector.broadcast %21 : vector<1x1xf32> to vector<1x8xf32>
    %23 = arith.addf %20, %22 : vector<1x8xf32>
    %c0_15 = arith.constant 0 : index
    %c0_16 = arith.constant 0 : index
    %24 = vector.load %arg4[%c0_15, %c0_16] : memref<2x8xf32, #tpu.memory_space<vmem>>, vector<1x8xf32>
    tpu.vector_store %arg4[%c0_15, %c0_16], %23 {strides = array<i32>} : memref<2x8xf32, #tpu.memory_space<vmem>>, vector<1x8xf32>,
    %c32 = arith.constant 32 : index
    %c0_17 = arith.constant 0 : index
    %25 = vector.load %arg2[%c32, %c0_17] : memref<160x128xbf16, #tpu.memory_space<vmem>>, vector<32x16xbf16>
    %cst_18 = arith.constant dense<0.000000e+00> : vector<32x8xf32>
    %26 = tpu.matmul %25, %1, %cst_18 {dimension_numbers = #tpu.dot_dimension_numbers<[1], [0], [0], [1], [0, 0, 1, 1], [], []>} : vector<32x16xbf16>, vector<16x8xbf16>, vector<32x8xf32> -> vector<32x8xf32>
    %c32_19 = arith.constant 32 : index
    %c0_20 = arith.constant 0 : index
    %27 = vector.load %arg3[%c32_19, %c0_20] : memref<160x1xf32, #tpu.memory_space<vmem>>, vector<32x1xf32>
    %28 = vector.broadcast %27 : vector<32x1xf32> to vector<32x8xf32>
    %29 = arith.addf %26, %28 : vector<32x8xf32>
    %cst_21 = arith.constant 0.000000e+00 : f32
    %30 = vector.broadcast %cst_21 : f32 to vector<32x8xf32>
    %31 = arith.maximumf %29, %30 : vector<32x8xf32>
    %32 = arith.truncf %31 : vector<32x8xf32> to vector<32x8xbf16>
    %c96 = arith.constant 96 : index
    %c0_22 = arith.constant 0 : index
    %33 = vector.load %arg2[%c96, %c0_22] : memref<160x128xbf16, #tpu.memory_space<vmem>>, vector<32x32xbf16>
    %cst_23 = arith.constant dense<0.000000e+00> : vector<32x8xf32>
    %34 = tpu.matmul %33, %32, %cst_23 {dimension_numbers = #tpu.dot_dimension_numbers<[1], [0], [0], [1], [0, 0, 1, 1], [], []>} : vector<32x32xbf16>, vector<32x8xbf16>, vector<32x8xf32> -> vector<32x8xf32>
    %c96_24 = arith.constant 96 : index
    %c0_25 = arith.constant 0 : index
    %35 = vector.load %arg3[%c96_24, %c0_25] : memref<160x1xf32, #tpu.memory_space<vmem>>, vector<32x1xf32>
    %36 = vector.broadcast %35 : vector<32x1xf32> to vector<32x8xf32>
    %37 = arith.addf %34, %36 : vector<32x8xf32>
    %cst_26 = arith.constant 0.000000e+00 : f32
    %38 = vector.broadcast %cst_26 : f32 to vector<32x8xf32>
    %39 = arith.maximumf %37, %38 : vector<32x8xf32>
    %40 = arith.truncf %39 : vector<32x8xf32> to vector<32x8xbf16>
    %c144 = arith.constant 144 : index
    %c0_27 = arith.constant 0 : index
    %41 = vector.load %arg2[%c144, %c0_27] : memref<160x128xbf16, #tpu.memory_space<vmem>>, vector<16x32xbf16>
    %cst_28 = arith.constant dense<0.000000e+00> : vector<16x8xf32>
    %42 = tpu.matmul %41, %40, %cst_28 {dimension_numbers = #tpu.dot_dimension_numbers<[1], [0], [0], [1], [0, 0, 1, 1], [], []>} : vector<16x32xbf16>, vector<32x8xbf16>, vector<16x8xf32> -> vector<16x8xf32>
    %43 = vector.extract_strided_slice %42 {offsets = [0, 0], sizes = [1, 8], strides = [1, 1]} : vector<16x8xf32> to vector<1x8xf32>
    %c144_29 = arith.constant 144 : index
    %c0_30 = arith.constant 0 : index
    %44 = vector.load %arg3[%c144_29, %c0_30] : memref<160x1xf32, #tpu.memory_space<vmem>>, vector<1x1xf32>
    %45 = vector.broadcast %44 : vector<1x1xf32> to vector<1x8xf32>
    %46 = arith.addf %43, %45 : vector<1x8xf32>
    %c1 = arith.constant 1 : index
    %c0_31 = arith.constant 0 : index
    %47 = vector.load %arg4[%c1, %c0_31] : memref<2x8xf32, #tpu.memory_space<vmem>>, vector<1x8xf32>
    tpu.vector_store %arg4[%c1, %c0_31], %46 {strides = array<i32>} : memref<2x8xf32, #tpu.memory_space<vmem>>, vector<1x8xf32>,
    return
  }
  func.func @transform_0(%arg0: i32) -> (i32, i32) {
    %c0_i32 = arith.constant 0 : i32
    %c0_i32_0 = arith.constant 0 : i32
    return %c0_i32, %arg0 : i32, i32
  }
  func.func @transform_1(%arg0: i32) -> (i32, i32) {
    %c0_i32 = arith.constant 0 : i32
    %c0_i32_0 = arith.constant 0 : i32
    %c0_i32_1 = arith.constant 0 : i32
    return %c0_i32, %c0_i32_0 : i32, i32
  }
  func.func @transform_2(%arg0: i32) -> (i32, i32) {
    %c0_i32 = arith.constant 0 : i32
    %c0_i32_0 = arith.constant 0 : i32
    %c0_i32_1 = arith.constant 0 : i32
    return %c0_i32, %c0_i32_0 : i32, i32
  }
  func.func @transform_3(%arg0: i32) -> (i32, i32) {
    %c0_i32 = arith.constant 0 : i32
    %c0_i32_0 = arith.constant 0 : i32
    return %c0_i32, %arg0 : i32, i32
  }
}

</mosaic_0001>

<llo_original>
// kernel: tpu_custom_call.1
$region0: #{tpu_custom_call.1}
  #allocation0 [shape = 'u32[]', space=smem, size = 0x4, offset = 0x4, fixed_abs, tag = 'smem constant byte address 0x4 - core index']
  #allocation1 [shape = 'u32[144,128]{1,0:T(1,128)}', space=vmem, size = 0x12000, scoped, tag = 'internal scratch']
  %s0 = inlined_call_operand.vmem [shape: f32[16,8], index: 0, kind: input, shape index: {}]
  %s1 = inlined_call_operand.vmem [shape: bf16[160,128], index: 1, kind: input, shape index: {}]
  %s2 = inlined_call_operand.vmem [shape: f32[160,1], index: 2, kind: input, shape index: {}]
  %s3 = inlined_call_operand.hbm [shape: f32[2,8], index: 3, kind: output, shape index: {}]
  %s4 = sld [smem:[#allocation0]]
  $region22: #{tpu_custom_call.1} parent=0
    _
  %s6 = ssub.s32 1, %s4
  %s7 = scalar_select 0, %s6, %s4
  $region1: #{tpu_custom_call.1} parent=0
    #allocation2 [shape = 'u8[1024]{0}', space=vmem, size = 0x400, scoped, tag = 'output window, operand 0, single buffered']
    #allocation3 [shape = 's32[1]{0}', space=sflag, size = 0x4, scoped, tag = 'scoped memory for tpu_custom_call.1']
    %8 = vsyncpa [#allocation3], 0
    // Predicated region
    $region2: #{tpu_custom_call.1} parent=1 // pred_check
      _
    $region3: #{tpu_custom_call.1} parent=1 // pred_check_branch
      %10 = sbr.rel (0) target = $region5
    $region4: #{tpu_custom_call.1} parent=1 // pred_region
      _
    $region5: #{tpu_custom_call.1} parent=1 // pred_fallthru
      _
    // Predicated region
    $region6: #{tpu_custom_call.1} parent=1 // pred_check
      _
    $region7: #{tpu_custom_call.1} parent=1 // pred_check_branch
      %12 = sbr.rel (0) target = $region9
    $region8: #{tpu_custom_call.1} parent=1 // pred_region
      _
    $region9: #{tpu_custom_call.1} parent=1 // pred_fallthru
      _
    // Predicated region
    $region10: #{tpu_custom_call.1} parent=1 // pred_check
      _
    $region11: #{tpu_custom_call.1} parent=1 // pred_check_branch
      %14 = sbr.rel (0) target = $region13
    $region12: #{tpu_custom_call.1} parent=1 // pred_region
      _
    $region13: #{tpu_custom_call.1} parent=1 // pred_fallthru
      _
    %v16 = vld [vmem:[%s0] sm:$0xff]
    %v17 = vld [vmem:[%s0 + $0x8] sm:$0xff]
    %v18 = vpack.c.bf16 %v17, %v16
    %v19 = vld [vmem:[%s1] sm:$0xf]
    %v20 = vld [vmem:[%s1 + $0x4] sm:$0xf]
    %v21 = vld [vmem:[%s1 + $0x8] sm:$0xf]
    %v22 = vld [vmem:[%s1 + $0xc] sm:$0xf]
    %v23 = vld [vmem:[%s2] sm:$0xff]
    %v24 = vld [vmem:[%s2 + $0x8] sm:$0xff]
    %v25 = vld [vmem:[%s2 + $0x10] sm:$0xff]
    %v26 = vld [vmem:[%s2 + $0x18] sm:$0xff]
    %28 = vset.pattern.permute.xlu0 0
    %29 = vperm.xlu0 %28, %v23
    %v30 = vpop.permute.xlu0 %29
    %33 = vset.pattern.permute.xlu0 0
    %34 = vperm.xlu0 %33, %v24
    %v35 = vpop.permute.xlu0 %34
    %38 = vset.pattern.permute.xlu0 0
    %39 = vperm.xlu0 %38, %v25
    %v40 = vpop.permute.xlu0 %39
    %43 = vset.pattern.permute.xlu0 0
    %44 = vperm.xlu0 %43, %v26
    %v45 = vpop.permute.xlu0 %44
    %v51 = vunpack.c.l.b16 %v19
    %v52 = vunpack.c.l.b16 %v20
    %v53 = vunpack.c.l.b16 %v21
    %v54 = vunpack.c.l.b16 %v22
    %v55 = vpack.c.b16 %v52, %v51
    %v56 = vpack.c.b16 %v54, %v53
    %vm57 = vcmask 130048
    %v59 = vsel %vm57, %v55, 0
    %v62 = vsel %vm57, %v56, 0
    %64 = vmatprep.subr.bf16.mxu0 0
    %65 = vmatpush1.bf16.msra.mxu0 0
    %66 = vmatprep.subr.bf16.mxu0 0
    %67 = vmatpush1.bf16.msra.mxu0 0
    %68 = vmatprep.subr.bf16.mxu0 0
    %69 = vmatpush1.bf16.msra.mxu0 0
    %70 = vmatprep.subr.bf16.mxu0 0
    %71 = vmatpush1.bf16.msra.mxu0 0
    %72 = vmatprep.subr.bf16.mxu0 0
    %73 = vmatpush1.bf16.msra.mxu0 0
    %74 = vmatprep.subr.bf16.mxu0 0
    %75 = vmatpush1.bf16.msra.mxu0 0
    %76 = vmatprep.subr.bf16.mxu0 0
    %77 = vmatpush1.bf16.msra.mxu0 0
    %78 = vmatprep.subr.bf16.mxu0 0
    %79 = vmatpush1.bf16.msra.mxu0 %v18
    %80 = vmatprep.subr.bf16.mxu0 0
    %81 = vmatpush2.bf16.msra.mxu0 0
    %82 = vmatprep.subr.bf16.mxu0 0
    %83 = vmatpush2.bf16.msra.mxu0 0
    %84 = vmatprep.subr.bf16.mxu0 0
    %85 = vmatpush2.bf16.msra.mxu0 0
    %86 = vmatprep.subr.bf16.mxu0 0
    %87 = vmatpush2.bf16.msra.mxu0 0
    %88 = vmatprep.subr.bf16.mxu0 0
    %89 = vmatpush2.bf16.msra.mxu0 0
    %90 = vmatprep.subr.bf16.mxu0 0
    %91 = vmatpush2.bf16.msra.mxu0 0
    %92 = vmatprep.subr.bf16.mxu0 0
    %93 = vmatpush2.bf16.msra.mxu0 0
    %94 = vmatprep.subr.bf16.mxu0 0
    %95 = vmatpush2.bf16.msra.mxu0 0
    %96 = vmatprep.mubr.bf16.mxu0 0
    %97 = vmatmul.mubr.bf16.gmra.mxu0 %v59
    %v98 = vpop.f32.mrf.mxu0
    %v99 = vadd.f32 %v30, %v98
    %v100 = vpop.f32.mrf.mxu0
    %v101 = vpop.f32.mrf.mxu0
    %v102 = vadd.f32 %v35, %v101
    %v103 = vpop.f32.mrf.mxu0
    %104 = vmatprep.mubr.bf16.mxu0 0
    %105 = vmatmul.mubr.bf16.gmra.mxu0 %v62
    %v106 = vpop.f32.mrf.mxu0
    %v107 = vadd.f32 %v40, %v106
    %v108 = vpop.f32.mrf.mxu0
    %v109 = vpop.f32.mrf.mxu0
    %v110 = vadd.f32 %v45, %v109
    %v111 = vpop.f32.mrf.mxu0
    %112 = vdwg.mxu0
    %v113 = vmax.f32 %v99, 0.0
    %v114 = vmax.f32 %v102, 0.0
    %v115 = vmax.f32 %v107, 0.0
    %v116 = vmax.f32 %v110, 0.0
    %v117 = vpack.c.bf16 %v114, %v113
    %v118 = vpack.c.bf16 %v116, %v115
    %v119 = vld [vmem:[%s1 + $0x20] sm:$0xf]
    %v120 = vld [vmem:[%s1 + $0x24] sm:$0xf]
    %v121 = vld [vmem:[%s1 + $0x28] sm:$0xf]
    %v122 = vld [vmem:[%s1 + $0x2c] sm:$0xf]
    %v123 = vld [vmem:[%s2 + $0x40] sm:$0xff]
    %v124 = vld [vmem:[%s2 + $0x48] sm:$0xff]
    %v125 = vld [vmem:[%s2 + $0x50] sm:$0xff]
    %v126 = vld [vmem:[%s2 + $0x58] sm:$0xff]
    %128 = vset.pattern.permute.xlu0 0
    %129 = vperm.xlu0 %128, %v123
    %v130 = vpop.permute.xlu0 %129
    %133 = vset.pattern.permute.xlu0 0
    %134 = vperm.xlu0 %133, %v124
    %v135 = vpop.permute.xlu0 %134
    %138 = vset.pattern.permute.xlu0 0
    %139 = vperm.xlu0 %138, %v125
    %v140 = vpop.permute.xlu0 %139
    %143 = vset.pattern.permute.xlu0 0
    %144 = vperm.xlu0 %143, %v126
    %v145 = vpop.permute.xlu0 %144
    %v151 = vunpack.c.l.b16 %v119
    %v152 = vunpack.c.l.b16 %v120
    %v153 = vunpack.c.l.b16 %v121
    %v154 = vunpack.c.l.b16 %v122
    %v155 = vpack.c.b16 %v152, %v151
    %v156 = vpack.c.b16 %v154, %v153
    %vm157 = vcmask 261120
    %v159 = vsel %vm157, %v155, 0
    %v162 = vsel %vm157, %v156, 0
    %164 = vmatprep.subr.bf16.mxu0 0
    %165 = vmatpush1.bf16.msra.mxu0 0
    %166 = vmatprep.subr.bf16.mxu0 0
    %167 = vmatpush1.bf16.msra.mxu0 0
    %168 = vmatprep.subr.bf16.mxu0 0
    %169 = vmatpush1.bf16.msra.mxu0 0
    %170 = vmatprep.subr.bf16.mxu0 0
    %171 = vmatpush1.bf16.msra.mxu0 0
    %172 = vmatprep.subr.bf16.mxu0 0
    %173 = vmatpush1.bf16.msra.mxu0 0
    %174 = vmatprep.subr.bf16.mxu0 0
    %175 = vmatpush1.bf16.msra.mxu0 0
    %176 = vmatprep.subr.bf16.mxu0 0
    %177 = vmatpush1.bf16.msra.mxu0 %v118
    %178 = vmatprep.subr.bf16.mxu0 0
    %179 = vmatpush1.bf16.msra.mxu0 %v117
    %180 = vmatprep.subr.bf16.mxu0 0
    %181 = vmatpush2.bf16.msra.mxu0 0
    %182 = vmatprep.subr.bf16.mxu0 0
    %183 = vmatpush2.bf16.msra.mxu0 0
    %184 = vmatprep.subr.bf16.mxu0 0
    %185 = vmatpush2.bf16.msra.mxu0 0
    %186 = vmatprep.subr.bf16.mxu0 0
    %187 = vmatpush2.bf16.msra.mxu0 0
    %188 = vmatprep.subr.bf16.mxu0 0
    %189 = vmatpush2.bf16.msra.mxu0 0
    %190 = vmatprep.subr.bf16.mxu0 0
    %191 = vmatpush2.bf16.msra.mxu0 0
    %192 = vmatprep.subr.bf16.mxu0 0
    %193 = vmatpush2.bf16.msra.mxu0 0
    %194 = vmatprep.subr.bf16.mxu0 0
    %195 = vmatpush2.bf16.msra.mxu0 0
    %196 = vmatprep.mubr.bf16.mxu0 0
    %197 = vmatmul.mubr.bf16.gmra.mxu0 %v159
    %v198 = vpop.f32.mrf.mxu0
    %v199 = vadd.f32 %v130, %v198
    %v200 = vpop.f32.mrf.mxu0
    %v201 = vpop.f32.mrf.mxu0
    %v202 = vadd.f32 %v135, %v201
    %v203 = vpop.f32.mrf.mxu0
    %204 = vmatprep.mubr.bf16.mxu0 0
    %205 = vmatmul.mubr.bf16.gmra.mxu0 %v162
    %v206 = vpop.f32.mrf.mxu0
    %v207 = vadd.f32 %v140, %v206
    %v208 = vpop.f32.mrf.mxu0
    %v209 = vpop.f32.mrf.mxu0
    %v210 = vadd.f32 %v145, %v209
    %v211 = vpop.f32.mrf.mxu0
    %212 = vdwg.mxu0
    %v213 = vmax.f32 %v199, 0.0
    %v214 = vmax.f32 %v202, 0.0
    %v215 = vmax.f32 %v207, 0.0
    %v216 = vmax.f32 %v210, 0.0
    %v217 = vpack.c.bf16 %v214, %v213
    %v218 = vpack.c.bf16 %v216, %v215
    %v219 = vld [vmem:[%s1 + $0x40] sm:$0xf]
    %v220 = vld [vmem:[%s1 + $0x44] sm:$0xf]
    %v223 = vunpack.c.l.b16 %v219
    %v224 = vunpack.c.l.b16 %v220
    %v225 = vpack.c.b16 %v224, %v223
    %v227 = vsel %vm157, %v225, 0
    %229 = vmatprep.subr.bf16.mxu0 0
    %230 = vmatpush1.bf16.msra.mxu0 0
    %231 = vmatprep.subr.bf16.mxu0 0
    %232 = vmatpush1.bf16.msra.mxu0 0
    %233 = vmatprep.subr.bf16.mxu0 0
    %234 = vmatpush1.bf16.msra.mxu0 0
    %235 = vmatprep.subr.bf16.mxu0 0
    %236 = vmatpush1.bf16.msra.mxu0 0
    %237 = vmatprep.subr.bf16.mxu0 0
    %238 = vmatpush1.bf16.msra.mxu0 0
    %239 = vmatprep.subr.bf16.mxu0 0
    %240 = vmatpush1.bf16.msra.mxu0 0
    %241 = vmatprep.subr.bf16.mxu0 0
    %242 = vmatpush1.bf16.msra.mxu0 %v218
    %243 = vmatprep.subr.bf16.mxu0 0
    %244 = vmatpush1.bf16.msra.mxu0 %v217
    %245 = vmatprep.subr.bf16.mxu0 0
    %246 = vmatpush2.bf16.msra.mxu0 0
    %247 = vmatprep.subr.bf16.mxu0 0
    %248 = vmatpush2.bf16.msra.mxu0 0
    %249 = vmatprep.subr.bf16.mxu0 0
    %250 = vmatpush2.bf16.msra.mxu0 0
    %251 = vmatprep.subr.bf16.mxu0 0
    %252 = vmatpush2.bf16.msra.mxu0 0
    %253 = vmatprep.subr.bf16.mxu0 0
    %254 = vmatpush2.bf16.msra.mxu0 0
    %255 = vmatprep.subr.bf16.mxu0 0
    %256 = vmatpush2.bf16.msra.mxu0 0
    %257 = vmatprep.subr.bf16.mxu0 0
    %258 = vmatpush2.bf16.msra.mxu0 0
    %259 = vmatprep.subr.bf16.mxu0 0
    %260 = vmatpush2.bf16.msra.mxu0 0
    %261 = vmatprep.mubr.bf16.mxu0 0
    %262 = vmatmul.mubr.bf16.gmra.mxu0 %v227
    %v263 = vpop.f32.mrf.mxu0
    %v264 = vadd.f32 0.0, %v263
    %v265 = vpop.f32.mrf.mxu0
    %v266 = vpop.f32.mrf.mxu0
    %v267 = vpop.f32.mrf.mxu0
    %268 = vdwg.mxu0
    %v269 = vld [vmem:[%s2 + $0x80] sm:$0x1]
    %271 = vset.pattern.permute.xlu0 0
    %272 = vperm.xlu0 %271, %v269
    %v273 = vpop.permute.xlu0 %272
    %v275 = vadd.f32 %v264, %v273
    %vm276 = vcmask 57344
    %277 = vst.msk [vmem:[#allocation2] sm:$0x1] %vm276, %v275
    %v278 = vld [vmem:[%s1 + $0x10] sm:$0xf]
    %v279 = vld [vmem:[%s1 + $0x14] sm:$0xf]
    %v280 = vld [vmem:[%s1 + $0x18] sm:$0xf]
    %v281 = vld [vmem:[%s1 + $0x1c] sm:$0xf]
    %v282 = vld [vmem:[%s2 + $0x20] sm:$0xff]
    %v283 = vld [vmem:[%s2 + $0x28] sm:$0xff]
    %v284 = vld [vmem:[%s2 + $0x30] sm:$0xff]
    %v285 = vld [vmem:[%s2 + $0x38] sm:$0xff]
    %287 = vset.pattern.permute.xlu0 0
    %288 = vperm.xlu0 %287, %v282
    %v289 = vpop.permute.xlu0 %288
    %292 = vset.pattern.permute.xlu0 0
    %293 = vperm.xlu0 %292, %v283
    %v294 = vpop.permute.xlu0 %293
    %297 = vset.pattern.permute.xlu0 0
    %298 = vperm.xlu0 %297, %v284
    %v299 = vpop.permute.xlu0 %298
    %302 = vset.pattern.permute.xlu0 0
    %303 = vperm.xlu0 %302, %v285
    %v304 = vpop.permute.xlu0 %303
    %v310 = vunpack.c.l.b16 %v278
    %v311 = vunpack.c.l.b16 %v279
    %v312 = vunpack.c.l.b16 %v280
    %v313 = vunpack.c.l.b16 %v281
    %v314 = vpack.c.b16 %v311, %v310
    %v315 = vpack.c.b16 %v313, %v312
    %v317 = vsel %vm57, %v314, 0
    %v320 = vsel %vm57, %v315, 0
    %322 = vmatprep.subr.bf16.mxu0 0
    %323 = vmatpush1.bf16.msra.mxu0 0
    %324 = vmatprep.subr.bf16.mxu0 0
    %325 = vmatpush1.bf16.msra.mxu0 0
    %326 = vmatprep.subr.bf16.mxu0 0
    %327 = vmatpush1.bf16.msra.mxu0 0
    %328 = vmatprep.subr.bf16.mxu0 0
    %329 = vmatpush1.bf16.msra.mxu0 0
    %330 = vmatprep.subr.bf16.mxu0 0
    %331 = vmatpush1.bf16.msra.mxu0 0
    %332 = vmatprep.subr.bf16.mxu0 0
    %333 = vmatpush1.bf16.msra.mxu0 0
    %334 = vmatprep.subr.bf16.mxu0 0
    %335 = vmatpush1.bf16.msra.mxu0 0
    %336 = vmatprep.subr.bf16.mxu0 0
    %337 = vmatpush1.bf16.msra.mxu0 %v18
    %338 = vmatprep.subr.bf16.mxu0 0
    %339 = vmatpush2.bf16.msra.mxu0 0
    %340 = vmatprep.subr.bf16.mxu0 0
    %341 = vmatpush2.bf16.msra.mxu0 0
    %342 = vmatprep.subr.bf16.mxu0 0
    %343 = vmatpush2.bf16.msra.mxu0 0
    %344 = vmatprep.subr.bf16.mxu0 0
    %345 = vmatpush2.bf16.msra.mxu0 0
    %346 = vmatprep.subr.bf16.mxu0 0
    %347 = vmatpush2.bf16.msra.mxu0 0
    %348 = vmatprep.subr.bf16.mxu0 0
    %349 = vmatpush2.bf16.msra.mxu0 0
    %350 = vmatprep.subr.bf16.mxu0 0
    %351 = vmatpush2.bf16.msra.mxu0 0
    %352 = vmatprep.subr.bf16.mxu0 0
    %353 = vmatpush2.bf16.msra.mxu0 0
    %354 = vmatprep.mubr.bf16.mxu0 0
    %355 = vmatmul.mubr.bf16.gmra.mxu0 %v317
    %v356 = vpop.f32.mrf.mxu0
    %v357 = vadd.f32 %v289, %v356
    %v358 = vpop.f32.mrf.mxu0
    %v359 = vpop.f32.mrf.mxu0
    %v360 = vadd.f32 %v294, %v359
    %v361 = vpop.f32.mrf.mxu0
    %362 = vmatprep.mubr.bf16.mxu0 0
    %363 = vmatmul.mubr.bf16.gmra.mxu0 %v320
    %v364 = vpop.f32.mrf.mxu0
    %v365 = vadd.f32 %v299, %v364
    %v366 = vpop.f32.mrf.mxu0
    %v367 = vpop.f32.mrf.mxu0
    %v368 = vadd.f32 %v304, %v367
    %v369 = vpop.f32.mrf.mxu0
    %370 = vdwg.mxu0
    %v371 = vmax.f32 %v357, 0.0
    %v372 = vmax.f32 %v360, 0.0
    %v373 = vmax.f32 %v365, 0.0
    %v374 = vmax.f32 %v368, 0.0
    %v375 = vpack.c.bf16 %v372, %v371
    %v376 = vpack.c.bf16 %v374, %v373
    %v377 = vld [vmem:[%s1 + $0x30] sm:$0xf]
    %v378 = vld [vmem:[%s1 + $0x34] sm:$0xf]
    %v379 = vld [vmem:[%s1 + $0x38] sm:$0xf]
    %v380 = vld [vmem:[%s1 + $0x3c] sm:$0xf]
    %v381 = vld [vmem:[%s2 + $0x60] sm:$0xff]
    %v382 = vld [vmem:[%s2 + $0x68] sm:$0xff]
    %v383 = vld [vmem:[%s2 + $0x70] sm:$0xff]
    %v384 = vld [vmem:[%s2 + $0x78] sm:$0xff]
    %386 = vset.pattern.permute.xlu0 0
    %387 = vperm.xlu0 %386, %v381
    %v388 = vpop.permute.xlu0 %387
    %391 = vset.pattern.permute.xlu0 0
    %392 = vperm.xlu0 %391, %v382
    %v393 = vpop.permute.xlu0 %392
    %396 = vset.pattern.permute.xlu0 0
    %397 = vperm.xlu0 %396, %v383
    %v398 = vpop.permute.xlu0 %397
    %401 = vset.pattern.permute.xlu0 0
    %402 = vperm.xlu0 %401, %v384
    %v403 = vpop.permute.xlu0 %402
    %v409 = vunpack.c.l.b16 %v377
    %v410 = vunpack.c.l.b16 %v378
    %v411 = vunpack.c.l.b16 %v379
    %v412 = vunpack.c.l.b16 %v380
    %v413 = vpack.c.b16 %v410, %v409
    %v414 = vpack.c.b16 %v412, %v411
    %v416 = vsel %vm157, %v413, 0
    %v419 = vsel %vm157, %v414, 0
    %421 = vmatprep.subr.bf16.mxu0 0
    %422 = vmatpush1.bf16.msra.mxu0 0
    %423 = vmatprep.subr.bf16.mxu0 0
    %424 = vmatpush1.bf16.msra.mxu0 0
    %425 = vmatprep.subr.bf16.mxu0 0
    %426 = vmatpush1.bf16.msra.mxu0 0
    %427 = vmatprep.subr.bf16.mxu0 0
    %428 = vmatpush1.bf16.msra.mxu0 0
    %429 = vmatprep.subr.bf16.mxu0 0
    %430 = vmatpush1.bf16.msra.mxu0 0
    %431 = vmatprep.subr.bf16.mxu0 0
    %432 = vmatpush1.bf16.msra.mxu0 0
    %433 = vmatprep.subr.bf16.mxu0 0
    %434 = vmatpush1.bf16.msra.mxu0 %v376
    %435 = vmatprep.subr.bf16.mxu0 0
    %436 = vmatpush1.bf16.msra.mxu0 %v375
    %437 = vmatprep.subr.bf16.mxu0 0
    %438 = vmatpush2.bf16.msra.mxu0 0
    %439 = vmatprep.subr.bf16.mxu0 0
    %440 = vmatpush2.bf16.msra.mxu0 0
    %441 = vmatprep.subr.bf16.mxu0 0
    %442 = vmatpush2.bf16.msra.mxu0 0
    %443 = vmatprep.subr.bf16.mxu0 0
    %444 = vmatpush2.bf16.msra.mxu0 0
    %445 = vmatprep.subr.bf16.mxu0 0
    %446 = vmatpush2.bf16.msra.mxu0 0
    %447 = vmatprep.subr.bf16.mxu0 0
    %448 = vmatpush2.bf16.msra.mxu0 0
    %449 = vmatprep.subr.bf16.mxu0 0
    %450 = vmatpush2.bf16.msra.mxu0 0
    %451 = vmatprep.subr.bf16.mxu0 0
    %452 = vmatpush2.bf16.msra.mxu0 0
    %453 = vmatprep.mubr.bf16.mxu0 0
    %454 = vmatmul.mubr.bf16.gmra.mxu0 %v416
    %v455 = vpop.f32.mrf.mxu0
    %v456 = vadd.f32 %v388, %v455
    %v457 = vpop.f32.mrf.mxu0
    %v458 = vpop.f32.mrf.mxu0
    %v459 = vadd.f32 %v393, %v458
    %v460 = vpop.f32.mrf.mxu0
    %461 = vmatprep.mubr.bf16.mxu0 0
    %462 = vmatmul.mubr.bf16.gmra.mxu0 %v419
    %v463 = vpop.f32.mrf.mxu0
    %v464 = vadd.f32 %v398, %v463
    %v465 = vpop.f32.mrf.mxu0
    %v466 = vpop.f32.mrf.mxu0
    %v467 = vadd.f32 %v403, %v466
    %v468 = vpop.f32.mrf.mxu0
    %469 = vdwg.mxu0
    %v470 = vmax.f32 %v456, 0.0
    %v471 = vmax.f32 %v459, 0.0
    %v472 = vmax.f32 %v464, 0.0
    %v473 = vmax.f32 %v467, 0.0
    %v474 = vpack.c.bf16 %v471, %v470
    %v475 = vpack.c.bf16 %v473, %v472
    %v476 = vld [vmem:[%s1 + $0x48] sm:$0xf]
    %v477 = vld [vmem:[%s1 + $0x4c] sm:$0xf]
    %v480 = vunpack.c.l.b16 %v476
    %v481 = vunpack.c.l.b16 %v477
    %v482 = vpack.c.b16 %v481, %v480
    %v484 = vsel %vm157, %v482, 0
    %486 = vmatprep.subr.bf16.mxu0 0
    %487 = vmatpush1.bf16.msra.mxu0 0
    %488 = vmatprep.subr.bf16.mxu0 0
    %489 = vmatpush1.bf16.msra.mxu0 0
    %490 = vmatprep.subr.bf16.mxu0 0
    %491 = vmatpush1.bf16.msra.mxu0 0
    %492 = vmatprep.subr.bf16.mxu0 0
    %493 = vmatpush1.bf16.msra.mxu0 0
    %494 = vmatprep.subr.bf16.mxu0 0
    %495 = vmatpush1.bf16.msra.mxu0 0
    %496 = vmatprep.subr.bf16.mxu0 0
    %497 = vmatpush1.bf16.msra.mxu0 0
    %498 = vmatprep.subr.bf16.mxu0 0
    %499 = vmatpush1.bf16.msra.mxu0 %v475
    %500 = vmatprep.subr.bf16.mxu0 0
    %501 = vmatpush1.bf16.msra.mxu0 %v474
    %502 = vmatprep.subr.bf16.mxu0 0
    %503 = vmatpush2.bf16.msra.mxu0 0
    %504 = vmatprep.subr.bf16.mxu0 0
    %505 = vmatpush2.bf16.msra.mxu0 0
    %506 = vmatprep.subr.bf16.mxu0 0
    %507 = vmatpush2.bf16.msra.mxu0 0
    %508 = vmatprep.subr.bf16.mxu0 0
    %509 = vmatpush2.bf16.msra.mxu0 0
    %510 = vmatprep.subr.bf16.mxu0 0
    %511 = vmatpush2.bf16.msra.mxu0 0
    %512 = vmatprep.subr.bf16.mxu0 0
    %513 = vmatpush2.bf16.msra.mxu0 0
    %514 = vmatprep.subr.bf16.mxu0 0
    %515 = vmatpush2.bf16.msra.mxu0 0
    %516 = vmatprep.subr.bf16.mxu0 0
    %517 = vmatpush2.bf16.msra.mxu0 0
    %518 = vmatprep.mubr.bf16.mxu0 0
    %519 = vmatmul.mubr.bf16.gmra.mxu0 %v484
    %v520 = vpop.f32.mrf.mxu0
    %v521 = vadd.f32 0.0, %v520
    %v522 = vpop.f32.mrf.mxu0
    %v523 = vpop.f32.mrf.mxu0
    %v524 = vpop.f32.mrf.mxu0
    %525 = vdwg.mxu0
    %v526 = vld [vmem:[%s2 + $0x90] sm:$0x1]
    %528 = vset.pattern.permute.xlu0 0
    %529 = vperm.xlu0 %528, %v526
    %v530 = vpop.permute.xlu0 %529
    %v532 = vadd.f32 %v521, %v530
    %533 = vst.msk [vmem:[#allocation2 + $0x1] sm:$0x1] %vm276, %v532
    // Predicated region
    $region14: #{tpu_custom_call.1} parent=1 // pred_check
      _
    $region15: #{tpu_custom_call.1} parent=1 // pred_check_branch
      %535 = sbr.rel (0) target = $region17
    $region16: #{tpu_custom_call.1} parent=1 // pred_region
      %s537 = ssub.s32 32, 32
      %538 = vsyncadd [#allocation3], %s537
      %s540 = sshll.u32 [#allocation2], 4
      %s541 = int_to_ptr.vmem [resolvable:$true] %s540
      %543 = dma.vmem_to_hbm [thread:$0]  %s541, 32, %s3, [#allocation3]
    $region17: #{tpu_custom_call.1} parent=1 // pred_fallthru
      _
    // Predicated region
    $region18: #{tpu_custom_call.1} parent=1 // pred_check
      _
    $region19: #{tpu_custom_call.1} parent=1 // pred_check_branch
      %545 = sbr.rel (0) target = $region21
    $region20: #{tpu_custom_call.1} parent=1 // pred_region
      %546 = dma.done [#allocation3], 32
    $region21: #{tpu_custom_call.1} parent=1 // pred_fallthru
      _
    %547 = vsyncpa [#allocation3], 1

</llo_original>
